<compile_context>
chip_gen: v7x
topology: tpu7x:2x2x1
jax: 0.10.0
libtpu: 0.0.40
codegen_flags: <defaults>
</compile_context>

<pallas_src>
import functools

import jax
import jax.numpy as jnp
from jax.experimental import pallas as pl
from jax.experimental.pallas import tpu as pltpu


def _group_norm_kernel(x_ref, w_ref, b_ref, o_ref, *, eps, n_valid):
    # x_ref: (npb, gpb, R, L)   w_ref / b_ref: (gpb, R, 1)
    x = x_ref[...]
    xf = x.astype(jnp.float32)

    # Single traversal of x: sum and sum-of-squares (lane reduce, then sublane).
    s = jnp.sum(xf, axis=3, keepdims=True)
    s = jnp.sum(s, axis=2, keepdims=True)                 # (npb, gpb, 1, 1)
    ss = jnp.sum(xf * xf, axis=3, keepdims=True)
    ss = jnp.sum(ss, axis=2, keepdims=True)               # (npb, gpb, 1, 1)

    mean = s * (1.0 / n_valid)
    # Unbiased variance (torch.Tensor.var default: divide by n-1).  The
    # single-pass form can go slightly negative from cancellation -> clamp.
    var = (ss - n_valid * mean * mean) * (1.0 / max(n_valid - 1.0, 1.0))
    var = jnp.maximum(var, 0.0)
    inv = jax.lax.rsqrt(var + eps)                        # EUP slot

    w = w_ref[...].astype(jnp.float32)[None, :, :, :]     # (1, gpb, R, 1)
    b = b_ref[...].astype(jnp.float32)[None, :, :, :]
    scale = w * inv                                       # (npb, gpb, R, 1)
    shift = b - mean * scale

    if x.dtype == jnp.bfloat16 or x.dtype == jnp.float16:
        # bf16-native VALUs on v6e/v7x: full-slab epilogue in the input dtype.
        # TODO(synk): keep the f32 epilogue on v5e (no bf16 VALU).
        o_ref[...] = (x * scale.astype(x.dtype) + shift.astype(x.dtype)).astype(o_ref.dtype)
    else:
        # fused normalize + affine: one mul + one add per element
        o_ref[...] = (xf * scale + shift).astype(o_ref.dtype)


def _vmem_capacity_bytes():
    try:
        return int(pltpu.get_tpu_info().vmem_capacity_bytes)
    except Exception:
        return 64 * 1024 * 1024   # conservative: v7x per-TensorCore VMEM


def group_norm_pallas(x, num_groups, weight, bias, eps=1e-5):
    orig_shape = x.shape
    N, C = orig_shape[0], orig_shape[1]
    G = num_groups
    assert C % G == 0, "input channel dimension must be divisible by num_groups"
    Cg = C // G
    spatial = 1
    for s in orig_shape[2:]:
        spatial *= s

    # ---- choose a copy-free (N, G, R, L) layout for one group's data --------
    if spatial % 128 == 0 and Cg % 8 != 0:
        # Fold channels into the sublane axis: lane-dense (128) last dim and no
        # Cg<8 sublane waste.  Per-channel weight is expanded along the rows.
        k = spatial // 128
        R, L = Cg * k, 128
        x_r = x.reshape(N, G, R, L)
        w_r = jnp.broadcast_to(weight.reshape(G, Cg, 1, 1), (G, Cg, k, 1)).reshape(G, R, 1)
        b_r = jnp.broadcast_to(bias.reshape(G, Cg, 1, 1), (G, Cg, k, 1)).reshape(G, R, 1)
    else:
        # Full-extent (Cg, spatial) block: legal for any size, no pad / slice.
        # Non-128-multiple spatial only costs masked vst's, not extra HBM traffic.
        R, L = Cg, spatial
        x_r = x.reshape(N, G, R, L)
        w_r = weight.reshape(G, R, 1)
        b_r = bias.reshape(G, R, 1)

    itemsize = jnp.dtype(x.dtype).itemsize
    R_pad = ((R + 7) // 8) * 8
    L_pad = ((L + 127) // 128) * 128

    # ---- per-chip scoped VMEM and block sizing -------------------------------
    vmem_cap = _vmem_capacity_bytes()                  # 128 MiB v5e/v6e, 64 MiB v7x
    vmem_limit = max(32 * 1024 * 1024, min(64 * 1024 * 1024, (vmem_cap * 3) // 4))
    budget = vmem_limit - 2 * 1024 * 1024              # headroom

    def footprint(npb, gpb):
        xb = npb * gpb * R_pad * L_pad * itemsize      # one x block (input dtype)
        wb = gpb * R_pad * 128 * 4                     # one lane-padded w (or b) block
        fb = npb * gpb * R_pad * L_pad * 4             # one f32 temporary of the block
        # double-buffered in + out, double-buffered w + b, ~3 live f32 temps
        return 4 * xb + 4 * wb + 3 * fb

    # Keep >= ~4 grid steps when possible so both v7x TensorCores get work.
    max_groups = max(1, (N * G) // 4)

    npb = 1
    for d in sorted((d for d in range(1, N + 1) if N % d == 0), reverse=True):
        if d <= max_groups and footprint(d, 1) <= budget:
            npb = d
            break
    gpb = 1
    for d in sorted((d for d in range(1, G + 1) if G % d == 0), reverse=True):
        if npb * d <= max_groups and footprint(npb, d) <= budget:
            gpb = d
            break

    if footprint(1, 1) > budget:
        # TODO(synk): spatially-tiled two-sweep path (accumulate sum/sumsq with a
        # pl.when-initialized scratch, then a second sweep for the affine) for
        # single groups that do not fit scoped VMEM; for now run one group per
        # step and raise the limit as far as the chip allows.
        npb, gpb = 1, 1
        vmem_limit = min((vmem_cap * 9) // 10, footprint(1, 1) + 2 * 1024 * 1024)

    # G outer, N inner: weight/bias block index is constant across inner steps.
    grid = (G // gpb, N // npb)
    kernel = functools.partial(
        _group_norm_kernel, eps=float(eps), n_valid=float(Cg * spatial)
    )

    out = pl.pallas_call(
        kernel,
        out_shape=jax.ShapeDtypeStruct((N, G, R, L), x.dtype),
        grid_spec=pltpu.PrefetchScalarGridSpec(
            num_scalar_prefetch=0,
            grid=grid,
            in_specs=[
                pl.BlockSpec((npb, gpb, R, L), lambda g, n: (n, g, 0, 0)),
                pl.BlockSpec((gpb, R, 1), lambda g, n: (g, 0, 0)),
                pl.BlockSpec((gpb, R, 1), lambda g, n: (g, 0, 0)),
            ],
            out_specs=pl.BlockSpec((npb, gpb, R, L), lambda g, n: (n, g, 0, 0)),
        ),
        compiler_params=pltpu.CompilerParams(
            dimension_semantics=("parallel", "parallel"),
            vmem_limit_bytes=int(vmem_limit),
        ),
    )(x_r, w_r, b_r)

    return out.reshape(orig_shape)


class GroupNorm:
    """JAX mirror of the PyTorch GroupNorm module (affine params init: w=1, b=0)."""

    def __init__(self, num_groups, num_channels, eps=1e-5, affine=True):
        self.num_groups = num_groups
        self.num_channels = num_channels
        self.eps = eps
        self.affine = affine
        if affine:
            self.weight = jnp.ones((num_channels,), dtype=jnp.float32)
            self.bias = jnp.zeros((num_channels,), dtype=jnp.float32)
        else:
            self.weight = None
            self.bias = None

    def __call__(self, x):
        if self.affine:
            return group_norm_pallas(
                x, self.num_groups, self.weight, self.bias, self.eps
            )
        # non-affine path == identity affine (weight=1, bias=0)
        w = jnp.ones((self.num_channels,), dtype=jnp.float32)
        b = jnp.zeros((self.num_channels,), dtype=jnp.float32)
        return group_norm_pallas(x, self.num_groups, w, b, self.eps)


def _reference_group_norm(x, num_groups, weight, bias, eps=1e-5):
    """Pure-JAX reference matching the PyTorch code (unbiased var)."""
    shp = x.shape
    N = shp[0]
    G = num_groups
    xr = x.reshape(N, G, -1).astype(jnp.float32)
    mean = xr.mean(-1, keepdims=True)
    var = xr.var(-1, keepdims=True, ddof=1)  # unbiased, like torch .var default
    xr = (xr - mean) / jnp.sqrt(var + eps)
    xr = xr.reshape(shp)
    view_shape = (1, -1) + (1,) * (len(shp) - 2)
    return xr * weight.reshape(view_shape) + bias.reshape(view_shape)


if __name__ == "__main__":
    key = jax.random.PRNGKey(0)
    k1, k2, k3, k4, k5, k6, k7, k8, k9 = jax.random.split(key, 9)

    # Case 1: 128-aligned spatial with Cg < 8 (exercises the channel-fold layout).
    N, C, H, W = 2, 4, 16, 16
    num_groups = 2
    x = jax.random.normal(k1, (N, C, H, W), dtype=jnp.float32)
    mod = GroupNorm(num_groups, C, eps=1e-5, affine=True)
    mod.weight = jax.random.normal(k2, (C,), dtype=jnp.float32)
    mod.bias = jax.random.normal(k3, (C,), dtype=jnp.float32)
    out = jax.block_until_ready(mod(x))
    ref = _reference_group_norm(x, num_groups, mod.weight, mod.bias, mod.eps)
    assert out.shape == x.shape
    assert jnp.allclose(out, ref, atol=1e-4, rtol=1e-4), "mismatch (folded layout)"

    # Case 2: non-128-aligned spatial (7*7 = 49) -> full-extent block, masked stores.
    N2, C2, H2, W2 = 2, 8, 7, 7
    num_groups2 = 4
    x2 = jax.random.normal(k4, (N2, C2, H2, W2), dtype=jnp.float32)
    mod2 = GroupNorm(num_groups2, C2, eps=1e-5, affine=True)
    mod2.weight = jax.random.normal(k5, (C2,), dtype=jnp.float32)
    mod2.bias = jax.random.normal(k6, (C2,), dtype=jnp.float32)
    out2 = jax.block_until_ready(mod2(x2))
    ref2 = _reference_group_norm(x2, num_groups2, mod2.weight, mod2.bias, mod2.eps)
    assert out2.shape == x2.shape
    assert jnp.allclose(out2, ref2, atol=1e-4, rtol=1e-4), "mismatch (masked-store layout)"

    # Case 3: aligned spatial with Cg % 8 == 0 (plain lane-dense layout, no fold).
    N3, C3, H3, W3 = 2, 32, 16, 16
    num_groups3 = 4
    x3 = jax.random.normal(k7, (N3, C3, H3, W3), dtype=jnp.float32)
    mod3 = GroupNorm(num_groups3, C3, eps=1e-5, affine=True)
    mod3.weight = jax.random.normal(k8, (C3,), dtype=jnp.float32)
    mod3.bias = jax.random.normal(k9, (C3,), dtype=jnp.float32)
    out3 = jax.block_until_ready(mod3(x3))
    ref3 = _reference_group_norm(x3, num_groups3, mod3.weight, mod3.bias, mod3.eps)
    assert out3.shape == x3.shape
    assert jnp.allclose(out3, ref3, atol=1e-4, rtol=1e-4), "mismatch (aligned layout)"

    print("KERNEL_OK")
</pallas_src>

<mosaic_0001>
module attributes {stable_mosaic.version = 11 : i64} {
  func.func @_group_norm_kernel(%arg0: i32, %arg1: i32, %arg2: memref<1x1x4x128xf32, #tpu.memory_space<vmem>>, %arg3: memref<1x4x1xf32, #tpu.memory_space<vmem>>, %arg4: memref<1x4x1xf32, #tpu.memory_space<vmem>>, %arg5: memref<1x1x4x128xf32, #tpu.memory_space<vmem>>) attributes {dimension_semantics = [#tpu.dimension_semantics<parallel>, #tpu.dimension_semantics<parallel>], iteration_bounds = array<i64: 2, 2>, scalar_prefetch = 0 : i64, scratch_operands = 0 : i64, tpu.core_type = #tpu.core_type<tc>, window_params = [{transform_indices = @transform_0, window_bounds = array<i64: 1, 1, 4, 128>}, {transform_indices = @transform_1, window_bounds = array<i64: 1, 4, 1>}, {transform_indices = @transform_2, window_bounds = array<i64: 1, 4, 1>}, {transform_indices = @transform_3, window_bounds = array<i64: 1, 1, 4, 128>}]} {
    %c0 = arith.constant 0 : index
    %c0_0 = arith.constant 0 : index
    %c0_1 = arith.constant 0 : index
    %c0_2 = arith.constant 0 : index
    %0 = vector.load %arg2[%c0, %c0_0, %c0_1, %c0_2] : memref<1x1x4x128xf32, #tpu.memory_space<vmem>>, vector<1x1x4x128xf32>
    %cst = arith.constant dense<0.000000e+00> : vector<1x1x4xf32>
    %1 = vector.multi_reduction <add>, %0, %cst [3] : vector<1x1x4x128xf32> to vector<1x1x4xf32>
    %2 = vector.shape_cast %1 : vector<1x1x4xf32> to vector<1x1x4x1xf32>
    %cst_3 = arith.constant dense<0.000000e+00> : vector<1x1x1xf32>
    %3 = vector.multi_reduction <add>, %2, %cst_3 [2] : vector<1x1x4x1xf32> to vector<1x1x1xf32>
    %4 = vector.shape_cast %3 : vector<1x1x1xf32> to vector<1x1x1x1xf32>
    %5 = arith.mulf %0, %0 : vector<1x1x4x128xf32>
    %cst_4 = arith.constant dense<0.000000e+00> : vector<1x1x4xf32>
    %6 = vector.multi_reduction <add>, %5, %cst_4 [3] : vector<1x1x4x128xf32> to vector<1x1x4xf32>
    %7 = vector.shape_cast %6 : vector<1x1x4xf32> to vector<1x1x4x1xf32>
    %cst_5 = arith.constant dense<0.000000e+00> : vector<1x1x1xf32>
    %8 = vector.multi_reduction <add>, %7, %cst_5 [2] : vector<1x1x4x1xf32> to vector<1x1x1xf32>
    %9 = vector.shape_cast %8 : vector<1x1x1xf32> to vector<1x1x1x1xf32>
    %cst_6 = arith.constant 0.001953125 : f32
    %10 = vector.broadcast %cst_6 : f32 to vector<1x1x1x1xf32>
    %11 = arith.mulf %4, %10 : vector<1x1x1x1xf32>
    %cst_7 = arith.constant 5.120000e+02 : f32
    %12 = vector.broadcast %cst_7 : f32 to vector<1x1x1x1xf32>
    %13 = arith.mulf %12, %11 : vector<1x1x1x1xf32>
    %14 = arith.mulf %13, %11 : vector<1x1x1x1xf32>
    %15 = arith.subf %9, %14 : vector<1x1x1x1xf32>
    %cst_8 = arith.constant 0.00195694715 : f32
    %16 = vector.broadcast %cst_8 : f32 to vector<1x1x1x1xf32>
    %17 = arith.mulf %15, %16 : vector<1x1x1x1xf32>
    %cst_9 = arith.constant 0.000000e+00 : f32
    %18 = vector.broadcast %cst_9 : f32 to vector<1x1x1x1xf32>
    %19 = arith.maximumf %17, %18 : vector<1x1x1x1xf32>
    %cst_10 = arith.constant 9.99999974E-6 : f32
    %20 = vector.broadcast %cst_10 : f32 to vector<1x1x1x1xf32>
    %21 = arith.addf %19, %20 : vector<1x1x1x1xf32>
    %22 = math.rsqrt %21 : vector<1x1x1x1xf32>
    %c0_11 = arith.constant 0 : index
    %c0_12 = arith.constant 0 : index
    %c0_13 = arith.constant 0 : index
    %23 = vector.load %arg3[%c0_11, %c0_12, %c0_13] : memref<1x4x1xf32, #tpu.memory_space<vmem>>, vector<1x4x1xf32>
    %24 = vector.shape_cast %23 : vector<1x4x1xf32> to vector<1x1x4x1xf32>
    %c0_14 = arith.constant 0 : index
    %c0_15 = arith.constant 0 : index
    %c0_16 = arith.constant 0 : index
    %25 = vector.load %arg4[%c0_14, %c0_15, %c0_16] : memref<1x4x1xf32, #tpu.memory_space<vmem>>, vector<1x4x1xf32>
    %26 = vector.shape_cast %25 : vector<1x4x1xf32> to vector<1x1x4x1xf32>
    %27 = vector.broadcast %22 : vector<1x1x1x1xf32> to vector<1x1x4x1xf32>
    %28 = arith.mulf %24, %27 : vector<1x1x4x1xf32>
    %29 = vector.broadcast %11 : vector<1x1x1x1xf32> to vector<1x1x4x1xf32>
    %30 = arith.mulf %29, %28 : vector<1x1x4x1xf32>
    %31 = arith.subf %26, %30 : vector<1x1x4x1xf32>
    %32 = vector.broadcast %28 : vector<1x1x4x1xf32> to vector<1x1x4x128xf32>
    %33 = arith.mulf %0, %32 : vector<1x1x4x128xf32>
    %34 = vector.broadcast %31 : vector<1x1x4x1xf32> to vector<1x1x4x128xf32>
    %35 = arith.addf %33, %34 : vector<1x1x4x128xf32>
    %c0_17 = arith.constant 0 : index
    %c0_18 = arith.constant 0 : index
    %c0_19 = arith.constant 0 : index
    %c0_20 = arith.constant 0 : index
    %36 = vector.load %arg5[%c0_17, %c0_18, %c0_19, %c0_20] : memref<1x1x4x128xf32, #tpu.memory_space<vmem>>, vector<1x1x4x128xf32>
    tpu.vector_store %arg5[%c0_17, %c0_18, %c0_19, %c0_20], %35 {strides = array<i32>} : memref<1x1x4x128xf32, #tpu.memory_space<vmem>>, vector<1x1x4x128xf32>,
    return
  }
  func.func @transform_0(%arg0: i32, %arg1: i32) -> (i32, i32, i32, i32) {
    %c0_i32 = arith.constant 0 : i32
    %c0_i32_0 = arith.constant 0 : i32
    %c0_i32_1 = arith.constant 0 : i32
    return %arg1, %arg0, %c0_i32, %c0_i32_0 : i32, i32, i32, i32
  }
  func.func @transform_1(%arg0: i32, %arg1: i32) -> (i32, i32, i32) {
    %c0_i32 = arith.constant 0 : i32
    %c0_i32_0 = arith.constant 0 : i32
    %c0_i32_1 = arith.constant 0 : i32
    return %arg0, %c0_i32, %c0_i32_0 : i32, i32, i32
  }
  func.func @transform_2(%arg0: i32, %arg1: i32) -> (i32, i32, i32) {
    %c0_i32 = arith.constant 0 : i32
    %c0_i32_0 = arith.constant 0 : i32
    %c0_i32_1 = arith.constant 0 : i32
    return %arg0, %c0_i32, %c0_i32_0 : i32, i32, i32
  }
  func.func @transform_3(%arg0: i32, %arg1: i32) -> (i32, i32, i32, i32) {
    %c0_i32 = arith.constant 0 : i32
    %c0_i32_0 = arith.constant 0 : i32
    %c0_i32_1 = arith.constant 0 : i32
    return %arg1, %arg0, %c0_i32, %c0_i32_0 : i32, i32, i32, i32
  }
}

</mosaic_0001>

<llo_original>
// kernel: tpu_custom_call.1
$region0: #{tpu_custom_call.1}
  #allocation0 [shape = 'u32[]', space=smem, size = 0x4, offset = 0x4, fixed_abs, tag = 'smem constant byte address 0x4 - core index']
  #allocation1 [shape = 'u32[144,128]{1,0:T(1,128)}', space=vmem, size = 0x12000, scoped, tag = 'internal scratch']
  %s0 = inlined_call_operand.vmem [shape: f32[2,2,4,128], index: 0, kind: input, shape index: {}]
  %s1 = inlined_call_operand.vmem [shape: f32[2,4,1], index: 1, kind: input, shape index: {}]
  %s2 = inlined_call_operand.vmem [shape: f32[2,4,1], index: 2, kind: input, shape index: {}]
  %s3 = inlined_call_operand.hbm [shape: f32[2,2,4,128], index: 3, kind: output, shape index: {}]
  %s4 = sld [smem:[#allocation0]]
  $region45: #{tpu_custom_call.1} parent=0
    _
  %s6 = ssub.s32 1, %s4
  %s7 = scalar_select 0, %s6, %s4
  $region1: #{tpu_custom_call.1} parent=0
    #allocation2 [shape = 'u8[4096]{0}', space=vmem, size = 0x1000, scoped, tag = 'output window, operand 0']
    #allocation3 [shape = 's32[2]{0}', space=sflag, size = 0x8, scoped, tag = 'scoped memory for tpu_custom_call.1']
    %8 = vsyncpa [#allocation3], 0
    %s9 = scalar_lea.sflag [#allocation3], 1
    %10 = vsyncpa %s9, 0
    loop: start=0, step=1, limit=6
    $region2: #{tpu_custom_call.1} parent=1 // loop_pre_header
      _
    $region3: #{tpu_custom_call.1} parent=1 // loop_header
      %s12 = sphi 0, %s16
      %p13 = scmp.ge.s32.totalorder %s12, 6
      %s19 = sphi 0, %s31
      %s20 = sphi 0, %s27
      %s21 = sphi 0, %s19
      %s22 = sphi 0, %s20
      %s23 = sphi 0, %s21
      %s24 = sphi 0, %s22
      %s36 = sphi 0, %s38
      %s39 = sphi 0, %s36
      %s40 = sphi 0, %s39
      %s56 = sphi 0, %s40
      %s62 = sphi 0, %s64
      %s65 = sphi 0, %s62
      %s66 = sphi 0, %s65
      %s82 = sphi 0, %s66
      %s88 = sphi 0, %s90
      %s91 = sphi 0, %s88
      %s92 = sphi 0, %s91
      %s108 = sphi 0, %s92
      %s116 = sphi 0, %s118
      %s119 = sphi 0, %s116
      %s120 = sphi 0, %s119
      %s136 = sphi 0, %s120
    $region4: #{tpu_custom_call.1} parent=1 // loop_header_branch
      %15 = sbr.rel (%p13) target = $region8
    $region5: #{tpu_custom_call.1} parent=1 // loop_body
      %s17 = ssub.s32 %s12, 1
      %s18 = ssub.s32 %s12, 2
      %s25 = sadd.s32 1, %s20
      %p26 = scmp.ge.s32.totalorder %s25, 2
      %s27 = scalar_select %p26, 0, %s25
      %s28 = sadd.s32 1, %s19
      %s29 = scalar_select %p26, %s28, %s19
      %p30 = scmp.ge.s32.totalorder %s29, 2
      %s31 = scalar_select %p30, 0, %s29
      %s32 = ssub.s32 %s20, %s27
      %s33 = ssub.s32 %s19, %s31
      %s34 = sor.u32 %s32, %s33
      %p35 = scmp.eq.s32.totalorder %s34, 0
      %s37 = sadd.s32 %s36, 1
      %s38 = scalar_select %p35, %s36, %s37
      %p41 = pneg %p35
      %p42 = scmp.eq.s32.totalorder %s12, 3
      %p43 = por %p41, %p42
      %p44 = scmp.ne.s32.totalorder %s36, %s39
      %p45 = scmp.eq.s32.totalorder %s12, 0
      %p46 = por %p44, %p45
      %p47 = scmp.ne.s32.totalorder %s36, %s39
      %p48 = scmp.eq.s32.totalorder %s17, 3
      %p49 = por %p47, %p48
      %p50 = scmp.ne.s32.totalorder %s39, %s40
      %p51 = scmp.eq.s32.totalorder %s17, 0
      %p52 = por %p50, %p51
      %p53 = scmp.ne.s32.totalorder %s39, %s40
      %p54 = scmp.eq.s32.totalorder %s18, 3
      %p55 = por %p53, %p54
      %p57 = scmp.ne.s32.totalorder %s40, %s56
      %p58 = scmp.eq.s32.totalorder %s18, 0
      %p59 = por %p57, %p58
      %s60 = ssub.s32 %s19, %s31
      %p61 = scmp.eq.s32.totalorder %s60, 0
      %s63 = sadd.s32 %s62, 1
      %s64 = scalar_select %p61, %s62, %s63
      %p67 = pneg %p61
      %p68 = scmp.eq.s32.totalorder %s12, 3
      %p69 = por %p67, %p68
      %p70 = scmp.ne.s32.totalorder %s62, %s65
      %p71 = scmp.eq.s32.totalorder %s12, 0
      %p72 = por %p70, %p71
      %p73 = scmp.ne.s32.totalorder %s62, %s65
      %p74 = scmp.eq.s32.totalorder %s17, 3
      %p75 = por %p73, %p74
      %p76 = scmp.ne.s32.totalorder %s65, %s66
      %p77 = scmp.eq.s32.totalorder %s17, 0
      %p78 = por %p76, %p77
      %p79 = scmp.ne.s32.totalorder %s65, %s66
      %p80 = scmp.eq.s32.totalorder %s18, 3
      %p81 = por %p79, %p80
      %p83 = scmp.ne.s32.totalorder %s66, %s82
      %p84 = scmp.eq.s32.totalorder %s18, 0
      %p85 = por %p83, %p84
      %s86 = ssub.s32 %s19, %s31
      %p87 = scmp.eq.s32.totalorder %s86, 0
      %s89 = sadd.s32 %s88, 1
      %s90 = scalar_select %p87, %s88, %s89
      %p93 = pneg %p87
      %p94 = scmp.eq.s32.totalorder %s12, 3
      %p95 = por %p93, %p94
      %p96 = scmp.ne.s32.totalorder %s88, %s91
      %p97 = scmp.eq.s32.totalorder %s12, 0
      %p98 = por %p96, %p97
      %p99 = scmp.ne.s32.totalorder %s88, %s91
      %p100 = scmp.eq.s32.totalorder %s17, 3
      %p101 = por %p99, %p100
      %p102 = scmp.ne.s32.totalorder %s91, %s92
      %p103 = scmp.eq.s32.totalorder %s17, 0
      %p104 = por %p102, %p103
      %p105 = scmp.ne.s32.totalorder %s91, %s92
      %p106 = scmp.eq.s32.totalorder %s18, 3
      %p107 = por %p105, %p106
      %p109 = scmp.ne.s32.totalorder %s92, %s108
      %p110 = scmp.eq.s32.totalorder %s18, 0
      %p111 = por %p109, %p110
      %s112 = ssub.s32 %s20, %s27
      %s113 = ssub.s32 %s19, %s31
      %s114 = sor.u32 %s112, %s113
      %p115 = scmp.eq.s32.totalorder %s114, 0
      %s117 = sadd.s32 %s116, 1
      %s118 = scalar_select %p115, %s116, %s117
      %p121 = pneg %p115
      %p122 = scmp.eq.s32.totalorder %s12, 3
      %p123 = por %p121, %p122
      %p124 = scmp.ne.s32.totalorder %s116, %s119
      %p125 = scmp.eq.s32.totalorder %s12, 0
      %p126 = por %p124, %p125
      %p127 = scmp.ne.s32.totalorder %s116, %s119
      %p128 = scmp.eq.s32.totalorder %s17, 3
      %p129 = por %p127, %p128
      %p130 = scmp.ne.s32.totalorder %s119, %s120
      %p131 = scmp.eq.s32.totalorder %s17, 0
      %p132 = por %p130, %p131
      %p133 = scmp.ne.s32.totalorder %s119, %s120
      %p134 = scmp.eq.s32.totalorder %s18, 3
      %p135 = por %p133, %p134
      %p137 = scmp.ne.s32.totalorder %s120, %s136
      %p138 = scmp.eq.s32.totalorder %s18, 0
      %p139 = por %p137, %p138
      %p140 = scmp.le.s32.totalorder 1, %s12
      %p141 = scmp.lt.s32.totalorder %s12, 5
      %p142 = pnand %p140, %p141
      %p143 = pneg %p142
      // Predicated region
      $region9: #{tpu_custom_call.1} parent=5 // pred_check
        _
      $region10: #{tpu_custom_call.1} parent=5 // pred_check_branch
        %145 = sbr.rel (%p142) target = $region12
      $region11: #{tpu_custom_call.1} parent=5 // pred_region
        %s146 = ssub.s32 %s12, 1
      $region12: #{tpu_custom_call.1} parent=5 // pred_fallthru
        _
      %p147 = scmp.lt.s32.totalorder %s12, 4
      // Predicated region
      $region13: #{tpu_custom_call.1} parent=5 // pred_check
        %p148 = pneg %p147
      $region14: #{tpu_custom_call.1} parent=5 // pred_check_branch
        %150 = sbr.rel (%p148) target = $region16
      $region15: #{tpu_custom_call.1} parent=5 // pred_region
        // Predicated region
        $region17: #{tpu_custom_call.1} parent=15 // pred_check
          %p151 = pneg %p46
        $region18: #{tpu_custom_call.1} parent=15 // pred_check_branch
          %153 = sbr.rel (%p151) target = $region20
        $region19: #{tpu_custom_call.1} parent=15 // pred_region
          %p154 = scmp.lt.s32.totalorder %s20, 1
          %s155 = scalar_select %p154, %s20, 1
          %p156 = scmp.lt.s32.totalorder %s19, 1
          %s157 = scalar_select %p156, %s19, 1
          %s158 = smul.addr %s155, 2
          %s159 = sadd.s32 %s157, %s158
          %s160 = smul.addr %s159, 4
          %s161 = scalar_lea.vmem %s0, %s160
        $region20: #{tpu_custom_call.1} parent=15 // pred_fallthru
          _
        // Predicated region
        $region21: #{tpu_custom_call.1} parent=15 // pred_check
          %p162 = pneg %p72
        $region22: #{tpu_custom_call.1} parent=15 // pred_check_branch
          %164 = sbr.rel (%p162) target = $region24
        $region23: #{tpu_custom_call.1} parent=15 // pred_region
          %p165 = scmp.lt.s32.totalorder %s19, 1
          %s166 = scalar_select %p165, %s19, 1
          %s167 = smul.addr %s166, 4
          %s168 = scalar_lea.vmem %s1, %s167
        $region24: #{tpu_custom_call.1} parent=15 // pred_fallthru
          _
        // Predicated region
        $region25: #{tpu_custom_call.1} parent=15 // pred_check
          %p169 = pneg %p98
        $region26: #{tpu_custom_call.1} parent=15 // pred_check_branch
          %171 = sbr.rel (%p169) target = $region28
        $region27: #{tpu_custom_call.1} parent=15 // pred_region
          %p172 = scmp.lt.s32.totalorder %s19, 1
          %s173 = scalar_select %p172, %s19, 1
          %s174 = smul.addr %s173, 4
          %s175 = scalar_lea.vmem %s2, %s174
        $region28: #{tpu_custom_call.1} parent=15 // pred_fallthru
          _
      $region16: #{tpu_custom_call.1} parent=5 // pred_fallthru
        _
      %p176 = scmp.le.s32.totalorder 1, %s12
      %p177 = scmp.lt.s32.totalorder %s12, 5
      %p178 = pnand %p176, %p177
      %p179 = pneg %p178
      // Predicated region
      $region29: #{tpu_custom_call.1} parent=5 // pred_check
        _
      $region30: #{tpu_custom_call.1} parent=5 // pred_check_branch
        %181 = sbr.rel (%p178) target = $region32
      $region31: #{tpu_custom_call.1} parent=5 // pred_region
        %s182 = ssub.s32 %s12, 1
        %p183 = scmp.lt.s32.totalorder %s22, 1
        %s184 = scalar_select %p183, %s22, 1
        %p185 = scmp.lt.s32.totalorder %s21, 1
        %s186 = scalar_select %p185, %s21, 1
        %s187 = smul.addr %s184, 2
        %s188 = sadd.s32 %s186, %s187
        %s189 = smul.addr %s188, 4
        %s190 = scalar_lea.vmem %s0, %s189
        %p191 = pneg %p52
        %p192 = pneg %p49
        %p193 = scmp.lt.s32.totalorder %s21, 1
        %s194 = scalar_select %p193, %s21, 1
        %s195 = smul.addr %s194, 4
        %s196 = scalar_lea.vmem %s1, %s195
        %p197 = pneg %p78
        %p198 = pneg %p75
        %p199 = scmp.lt.s32.totalorder %s21, 1
        %s200 = scalar_select %p199, %s21, 1
        %s201 = smul.addr %s200, 4
        %s202 = scalar_lea.vmem %s2, %s201
        %p203 = pneg %p104
        %p204 = pneg %p101
        %p205 = pneg %p132
        %p206 = pneg %p129
        %s207 = sand.u32 %s119, 1
        %s208 = scalar_lea.sflag [#allocation3], %s207
        %s209 = sand.u32 %s119, 1
        %s210 = smul.addr %s209, 4
        %s211 = scalar_lea.vmem [#allocation2], %s210
        %p212 = scmp.lt.s32.totalorder %s22, 1
        %s213 = scalar_select %p212, %s22, 1
        %p214 = scmp.lt.s32.totalorder %s21, 1
        %s215 = scalar_select %p214, %s21, 1
        %s216 = smul.addr %s213, 2
        %s217 = sadd.s32 %s215, %s216
        %s218 = smul.addr %s217, 4
        %s219 = scalar_lea.vmem %s0, %s218
        %p220 = scmp.lt.s32.totalorder %s21, 1
        %s221 = scalar_select %p220, %s21, 1
        %s222 = smul.addr %s221, 4
        %s223 = scalar_lea.vmem %s1, %s222
        %p224 = scmp.lt.s32.totalorder %s21, 1
        %s225 = scalar_select %p224, %s21, 1
        %s226 = smul.addr %s225, 4
        %s227 = scalar_lea.vmem %s2, %s226
        %v228 = vld [vmem:[%s219] sm:$0xf]
        %vm229 = vcmask 1043456
        %v230 = vsel %vm229, %v228, 0.0
        %231 = vadd.xlane.f32.xlu0 %v230
        %v232 = vpop.xlane.xlu0 %231
        %v233 = vsel %vm229, %v232, 0.0
        %v234 = vrot.slane %v233, 4
        %v235 = vadd.f32 %v233, %v234
        %v236 = vrot.slane %v235, 2
        %v237 = vadd.f32 %v235, %v236
        %v238 = vrot.slane %v237, 1
        %v239 = vadd.f32 %v237, %v238
        %v240 = vmul.f32 %v228, %v228
        %v241 = vsel %vm229, %v240, 0.0
        %242 = vadd.xlane.f32.xlu0 %v241
        %v243 = vpop.xlane.xlu0 %242
        %v244 = vsel %vm229, %v243, 0.0
        %v245 = vrot.slane %v244, 4
        %v246 = vadd.f32 %v244, %v245
        %v247 = vrot.slane %v246, 2
        %v248 = vadd.f32 %v246, %v247
        %v249 = vrot.slane %v248, 1
        %v250 = vadd.f32 %v248, %v249
        %v251 = vmul.f32 %v239, 0.001953125
        %v252 = vmul.f32 %v251, 512.0
        %v253 = vmul.f32 %v252, %v251
        %v254 = vsub.f32 %v250, %v253
        %v255 = vmul.f32 %v254, 0.0019569471
        %v256 = vmax.f32 %v255, 0.0
        %v257 = vadd.f32 %v256, 1e-05
        %v258 = vrsqrt.pop %v257
        %v259 = vld [vmem:[%s223] sm:$0xf]
        %v260 = vld [vmem:[%s227] sm:$0xf]
        %v261 = vmul.f32 %v259, %v258
        %v262 = vmul.f32 %v251, %v261
        %v263 = vsub.f32 %v260, %v262
        %265 = vset.pattern.permute.xlu0 0
        %266 = vperm.xlu0 %265, %v261
        %v267 = vpop.permute.xlu0 %266
        %v269 = vmul.f32 %v228, %v267
        %271 = vset.pattern.permute.xlu0 0
        %272 = vperm.xlu0 %271, %v263
        %v273 = vpop.permute.xlu0 %272
        %v275 = vadd.f32 %v269, %v273
        %276 = vst [vmem:[%s211] sm:$0xf] %v275
        %s277 = sand.u32 %s119, 1
        %s278 = scalar_lea.sflag [#allocation3], %s277
        %s279 = sand.u32 %s119, 1
        %s280 = smul.addr %s279, 4
        %s281 = scalar_lea.vmem [#allocation2], %s280
        // Predicated region
        $region33: #{tpu_custom_call.1} parent=31 // pred_check
          %p282 = pneg %p129
        $region34: #{tpu_custom_call.1} parent=31 // pred_check_branch
          %284 = sbr.rel (%p282) target = $region36
        $region35: #{tpu_custom_call.1} parent=31 // pred_region
          %s286 = ssub.s32 64, 64
          %287 = vsyncadd %s278, %s286
          %s288 = smul.addr %s22, 2
          %s289 = sadd.s32 %s21, %s288
          %s290 = smul.addr %s289, 64
          %s291 = scalar_lea.hbm %s3, %s290
          %s293 = sshll.u32 %s281, 4
          %s294 = int_to_ptr.vmem [resolvable:$true] %s293
          %296 = dma.vmem_to_hbm [thread:$0]  %s294, 64, %s291, %s278
        $region36: #{tpu_custom_call.1} parent=31 // pred_fallthru
          _
      $region32: #{tpu_custom_call.1} parent=5 // pred_fallthru
        _
      %p297 = scmp.le.s32.totalorder 2, %s12
      // Predicated region
      $region37: #{tpu_custom_call.1} parent=5 // pred_check
        %p298 = pneg %p297
      $region38: #{tpu_custom_call.1} parent=5 // pred_check_branch
        %300 = sbr.rel (%p298) target = $region40
      $region39: #{tpu_custom_call.1} parent=5 // pred_region
        %s301 = ssub.s32 %s12, 2
        // Predicated region
        $region41: #{tpu_custom_call.1} parent=39 // pred_check
          %p302 = pneg %p135
        $region42: #{tpu_custom_call.1} parent=39 // pred_check_branch
          %304 = sbr.rel (%p302) target = $region44
        $region43: #{tpu_custom_call.1} parent=39 // pred_region
          %s305 = sand.u32 %s120, 1
          %s306 = scalar_lea.sflag [#allocation3], %s305
          %s307 = sand.u32 %s120, 1
          %s308 = smul.addr %s307, 4
          %s309 = scalar_lea.vmem [#allocation2], %s308
          %310 = dma.done %s306, 64
        $region44: #{tpu_custom_call.1} parent=39 // pred_fallthru
          _
      $region40: #{tpu_custom_call.1} parent=5 // pred_fallthru
        _
    $region6: #{tpu_custom_call.1} parent=1 // loop_footer
      %s16 = sadd.s32 1, %s12
    $region7: #{tpu_custom_call.1} parent=1 // loop_footer_branch
      %11 = sbr.rel target = $region3
    $region8: #{tpu_custom_call.1} parent=1 // loop_exit
      _
    %311 = vsyncpa [#allocation3], 1
    %s312 = scalar_lea.sflag [#allocation3], 1
    %313 = vsyncpa %s312, 1

</llo_original>
